<compile_context>
chip_gen: v7x
topology: tpu7x:2x2x1
jax: 0.10.0
libtpu: 0.0.40
codegen_flags: <defaults>
</compile_context>

<pallas_src>
import functools
import math

import jax
import jax.numpy as jnp
from jax.experimental import pallas as pl
from jax.experimental.pallas import tpu as pltpu


# --------------------------------------------------------------------------
# Kernels
# --------------------------------------------------------------------------
def _linear_kernel_out_acc(x_ref, w_ref, b_ref, o_ref):
    """f32-output variant: accumulate directly in the resident output block."""
    k = pl.program_id(2)

    @pl.when(k == 0)
    def _():
        o_ref[...] = jnp.zeros_like(o_ref)

    o_ref[...] += jnp.dot(
        x_ref[...], w_ref[...], preferred_element_type=jnp.float32
    )

    @pl.when(k == pl.num_programs(2) - 1)
    def _():
        o_ref[...] += b_ref[...].astype(o_ref.dtype)


def _linear_kernel_scratch_acc(x_ref, w_ref, b_ref, o_ref, acc_ref):
    """Narrow-output variant: f32 VMEM accumulator, cast once in the epilogue."""
    k = pl.program_id(2)

    @pl.when(k == 0)
    def _():
        acc_ref[...] = jnp.zeros_like(acc_ref)

    acc_ref[...] += jnp.dot(
        x_ref[...], w_ref[...], preferred_element_type=jnp.float32
    )

    @pl.when(k == pl.num_programs(2) - 1)
    def _():
        o_ref[...] = (
            acc_ref[...] + b_ref[...].astype(jnp.float32)
        ).astype(o_ref.dtype)


# --------------------------------------------------------------------------
# Tiling helpers
# --------------------------------------------------------------------------
def _round_up(a, b):
    return ((a + b - 1) // b) * b


def _sublane_multiple(dtype):
    itemsize = jnp.dtype(dtype).itemsize
    if itemsize >= 4:
        return 8
    if itemsize == 2:
        return 16
    return 32


def _largest_divisor_tile(total, multiple, max_tile, prefer=None):
    """Largest t <= max_tile that is a multiple of `multiple` and divides `total`.

    If `prefer` (e.g. 256 for the MXU) is given, multiples of `prefer` are
    tried first; falls back to multiples of `multiple`.
    """
    def scan(step):
        best = None
        t = step
        limit = min(max_tile, total)
        while t <= limit:
            if total % t == 0:
                best = t
            t += step
        return best

    if prefer and prefer > multiple and prefer % multiple == 0:
        best = scan(prefer)
        if best is not None:
            return best
    best = scan(multiple)
    return best if best is not None else multiple


@functools.lru_cache(maxsize=1)
def _is_v5e():
    try:
        kind = jax.devices()[0].device_kind.lower()
    except Exception:
        return False
    return ("v5e" in kind) or ("v5 lite" in kind) or ("v5lite" in kind)


def _block_spec(shape, index_map, buffer_count=None):
    """BlockSpec with optional deeper pipelining (falls back if unsupported)."""
    if buffer_count is not None and hasattr(pl, "Buffered"):
        try:
            return pl.BlockSpec(
                shape, index_map, pipeline_mode=pl.Buffered(buffer_count)
            )
        except TypeError:
            pass
    return pl.BlockSpec(shape, index_map)


# --------------------------------------------------------------------------
# Forward (2-D padded matmul)
# --------------------------------------------------------------------------
def _linear_forward_2d(x2d, w_kn, b2d, *, m, n, k, kp, np_, tn, tk, max_tm):
    dtype = x2d.dtype
    out_dtype = dtype  # nn.Linear semantics: output dtype == input dtype
    sub = _sublane_multiple(dtype)

    # Adaptive M tile: largest divisor of the sublane-rounded M (dtype-aware).
    mp = _round_up(m, sub)
    tm = _largest_divisor_tile(mp, sub, max_tm, prefer=256)

    # v7x has 2 TensorCores: if both parallel axes would have a single block,
    # split N so the megacore sharding actually has work for both cores.
    if mp // tm == 1 and np_ // tn == 1 and np_ >= 256:
        tn = _largest_divisor_tile(np_, 128, np_ // 2)

    x_pad = x2d
    if (mp, kp) != (m, k):
        x_pad = jnp.pad(x2d, ((0, mp - m), (0, kp - k)))

    grid = (mp // tm, np_ // tn, kp // tk)
    grid_m, grid_n, _ = grid

    use_out_acc = jnp.dtype(out_dtype) == jnp.dtype(jnp.float32)
    kernel = _linear_kernel_out_acc if use_out_acc else _linear_kernel_scratch_acc
    scratch_shapes = [] if use_out_acc else [pltpu.VMEM((tm, tn), jnp.float32)]

    # v5e: deeper buffering on the streamed operands (weight/x streaming bound).
    stream_bufs = 3 if _is_v5e() else None

    in_specs = [
        _block_spec((tm, tk), lambda i, j, kk: (i, kk), stream_bufs),  # x tile
        _block_spec((tk, tn), lambda i, j, kk: (kk, j), stream_bufs),  # W tile
        pl.BlockSpec((1, tn), lambda i, j, kk: (0, j)),                # bias
    ]

    x_item = jnp.dtype(dtype).itemsize
    w_item = jnp.dtype(w_kn.dtype).itemsize
    b_item = jnp.dtype(b2d.dtype).itemsize
    o_item = jnp.dtype(out_dtype).itemsize
    cost = pl.CostEstimate(
        flops=2 * m * n * k,
        transcendentals=0,
        bytes_accessed=(
            mp * kp * x_item * grid_n      # x is re-read once per N block
            + kp * np_ * w_item * grid_m   # W is re-read once per M block
            + np_ * b_item
            + mp * np_ * o_item
        ),
    )

    # VMEM footprint: buffered streams + resident output (+ optional acc).
    n_bufs = stream_bufs or 2
    vmem_needed = (
        n_bufs * (tm * tk * x_item + tk * tn * w_item + tn * b_item)
        + 2 * tm * tn * o_item
        + (0 if use_out_acc else tm * tn * 4)
    )
    compiler_kwargs = dict(
        dimension_semantics=("parallel", "parallel", "arbitrary")
    )
    if vmem_needed > (28 << 20):  # only raise the scoped limit when needed
        compiler_kwargs["vmem_limit_bytes"] = min(
            int(vmem_needed * 5 // 4), 60 << 20
        )

    out2d = pl.pallas_call(
        kernel,
        out_shape=jax.ShapeDtypeStruct((mp, np_), out_dtype),
        grid_spec=pltpu.PrefetchScalarGridSpec(
            num_scalar_prefetch=0,
            grid=grid,
            in_specs=in_specs,
            out_specs=pl.BlockSpec((tm, tn), lambda i, j, kk: (i, j)),
            scratch_shapes=scratch_shapes,
        ),
        compiler_params=pltpu.CompilerParams(**compiler_kwargs),
        cost_estimate=cost,
    )(x_pad, w_kn, b2d)

    if (mp, np_) != (m, n):
        out2d = out2d[:m, :n]
    return out2d


# --------------------------------------------------------------------------
# Module wrapper: weight is transposed + padded ONCE at construction.
# --------------------------------------------------------------------------
class PallasLinearProjection:
    """Pallas equivalent of `nn.Linear(input_dim, output_dim)` forward.

    weight: (output_dim, input_dim)  (PyTorch convention)
    bias:   (output_dim,)
    __call__(x): x (..., input_dim) -> (..., output_dim)
    """

    def __init__(self, weight, bias, *, max_tm=512, max_tn=512, max_tk=1024):
        weight = jnp.asarray(weight)
        bias = jnp.asarray(bias)
        n, k = weight.shape
        assert bias.shape == (n,)
        self.n, self.k = n, k
        self.max_tm = max_tm

        # Padded param dims are fixed to 128-multiples (independent of the
        # exact tile choice, since tiles are chosen as divisors of these).
        self.kp = _round_up(k, 128)
        self.np_ = _round_up(n, 128)

        # One-time relayout: (N, K) -> (K, N), zero-padded.  K zero-padding
        # contributes 0 to the accumulation; padded N columns are sliced off.
        w_kn = weight.T
        if (self.kp, self.np_) != (k, n):
            w_kn = jnp.pad(w_kn, ((0, self.kp - k), (0, self.np_ - n)))
        self.w_kn = w_kn

        b2d = bias.reshape(1, n)
        if self.np_ != n:
            b2d = jnp.pad(b2d, ((0, 0), (0, self.np_ - n)))
        self.b2d = b2d

        # Adaptive N / K tiles (fixed per parameter set): largest 128-multiple
        # divisors of the padded dims, preferring 256-multiples for the MXU.
        self.tn = _largest_divisor_tile(self.np_, 128, max_tn, prefer=256)
        self.tk = _largest_divisor_tile(self.kp, 128, max_tk, prefer=256)

    def __call__(self, x):
        *lead, k = x.shape
        assert k == self.k, "input_dim mismatch"
        m = math.prod(lead) if lead else 1
        out2d = _linear_forward_2d(
            x.reshape(m, k), self.w_kn, self.b2d,
            m=m, n=self.n, k=k, kp=self.kp, np_=self.np_,
            tn=self.tn, tk=self.tk, max_tm=self.max_tm,
        )
        return out2d.reshape(*lead, self.n)


# --------------------------------------------------------------------------
# Self-test
# --------------------------------------------------------------------------
if __name__ == "__main__":
    # Shapes consistent with the module: batch=2, seq=8, input_dim=32 -> output_dim=64.
    batch, seq, input_dim, output_dim = 2, 8, 32, 64

    key = jax.random.PRNGKey(0)
    kx, kw, kb = jax.random.split(key, 3)

    x = jax.random.normal(kx, (batch, seq, input_dim), dtype=jnp.float32)
    # PyTorch-Linear shaped params: W [out, in], b [out]
    bound = 1.0 / (input_dim ** 0.5)
    weight = jax.random.uniform(kw, (output_dim, input_dim), jnp.float32, -bound, bound)
    bias = jax.random.uniform(kb, (output_dim,), jnp.float32, -bound, bound)

    proj = PallasLinearProjection(weight, bias)
    out = jax.block_until_ready(proj(x))

    # Reference check in plain JAX.
    ref = x @ weight.T + bias
    assert out.shape == (batch, seq, output_dim)
    assert jnp.allclose(out, ref, atol=1e-5, rtol=1e-5), float(
        jnp.max(jnp.abs(out - ref))
    )

    print("KERNEL_OK")
</pallas_src>

<mosaic_0001>
module attributes {stable_mosaic.version = 11 : i64} {
  func.func @_linear_kernel_out_acc(%arg0: i32, %arg1: i32, %arg2: i32, %arg3: memref<16x128xf32, #tpu.memory_space<vmem>>, %arg4: memref<128x128xf32, #tpu.memory_space<vmem>>, %arg5: memref<1x128xf32, #tpu.memory_space<vmem>>, %arg6: memref<16x128xf32, #tpu.memory_space<vmem>>) attributes {dimension_semantics = [#tpu.dimension_semantics<parallel>, #tpu.dimension_semantics<parallel>, #tpu.dimension_semantics<arbitrary>], iteration_bounds = array<i64: 1, 1, 1>, scalar_prefetch = 0 : i64, scratch_operands = 0 : i64, tpu.core_type = #tpu.core_type<tc>, window_params = [{transform_indices = @transform_0, window_bounds = array<i64: 16, 128>}, {transform_indices = @transform_1, window_bounds = array<i64: 128, 128>}, {transform_indices = @transform_2, window_bounds = array<i64: 1, 128>}, {transform_indices = @transform_3, window_bounds = array<i64: 16, 128>}]} {
    %c0_i32 = arith.constant 0 : i32
    %0 = arith.cmpi eq, %arg2, %c0_i32 : i32
    %1 = arith.extui %0 : i1 to i32
    %c0_i32_0 = arith.constant 0 : i32
    %2 = arith.cmpi ne, %1, %c0_i32_0 : i32
    scf.if %2 {
      %cst_10 = arith.constant 0.000000e+00 : f32
      %12 = vector.broadcast %cst_10 : f32 to vector<16x128xf32>
      %c0_11 = arith.constant 0 : index
      %c0_12 = arith.constant 0 : index
      %13 = vector.load %arg6[%c0_11, %c0_12] : memref<16x128xf32, #tpu.memory_space<vmem>>, vector<16x128xf32>
      tpu.vector_store %arg6[%c0_11, %c0_12], %12 {strides = array<i32>} : memref<16x128xf32, #tpu.memory_space<vmem>>, vector<16x128xf32>,
    } else {
    }
    %c0 = arith.constant 0 : index
    %c0_1 = arith.constant 0 : index
    %3 = vector.load %arg6[%c0, %c0_1] : memref<16x128xf32, #tpu.memory_space<vmem>>, vector<16x128xf32>
    %c0_2 = arith.constant 0 : index
    %c0_3 = arith.constant 0 : index
    %4 = vector.load %arg3[%c0_2, %c0_3] : memref<16x128xf32, #tpu.memory_space<vmem>>, vector<16x128xf32>
    %c0_4 = arith.constant 0 : index
    %c0_5 = arith.constant 0 : index
    %5 = vector.load %arg4[%c0_4, %c0_5] : memref<128x128xf32, #tpu.memory_space<vmem>>, vector<128x128xf32>
    %cst = arith.constant dense<0.000000e+00> : vector<16x128xf32>
    %6 = tpu.matmul %4, %5, %cst {dimension_numbers = #tpu.dot_dimension_numbers<[1], [0], [0], [1], [0, 0, 1, 1], [], []>} : vector<16x128xf32>, vector<128x128xf32>, vector<16x128xf32> -> vector<16x128xf32>
    %7 = arith.addf %3, %6 : vector<16x128xf32>
    %c0_6 = arith.constant 0 : index
    %c0_7 = arith.constant 0 : index
    %8 = vector.load %arg6[%c0_6, %c0_7] : memref<16x128xf32, #tpu.memory_space<vmem>>, vector<16x128xf32>
    tpu.vector_store %arg6[%c0_6, %c0_7], %7 {strides = array<i32>} : memref<16x128xf32, #tpu.memory_space<vmem>>, vector<16x128xf32>,
    %c0_i32_8 = arith.constant 0 : i32
    %9 = arith.cmpi eq, %arg2, %c0_i32_8 : i32
    %10 = arith.extui %9 : i1 to i32
    %c0_i32_9 = arith.constant 0 : i32
    %11 = arith.cmpi ne, %10, %c0_i32_9 : i32
    scf.if %11 {
      %c0_10 = arith.constant 0 : index
      %c0_11 = arith.constant 0 : index
      %12 = vector.load %arg6[%c0_10, %c0_11] : memref<16x128xf32, #tpu.memory_space<vmem>>, vector<16x128xf32>
      %c0_12 = arith.constant 0 : index
      %c0_13 = arith.constant 0 : index
      %13 = vector.load %arg5[%c0_12, %c0_13] : memref<1x128xf32, #tpu.memory_space<vmem>>, vector<1x128xf32>
      %14 = vector.broadcast %13 : vector<1x128xf32> to vector<16x128xf32>
      %15 = arith.addf %12, %14 : vector<16x128xf32>
      %c0_14 = arith.constant 0 : index
      %c0_15 = arith.constant 0 : index
      %16 = vector.load %arg6[%c0_14, %c0_15] : memref<16x128xf32, #tpu.memory_space<vmem>>, vector<16x128xf32>
      tpu.vector_store %arg6[%c0_14, %c0_15], %15 {strides = array<i32>} : memref<16x128xf32, #tpu.memory_space<vmem>>, vector<16x128xf32>,
    } else {
    }
    return
  }
  func.func @transform_0(%arg0: i32, %arg1: i32, %arg2: i32) -> (i32, i32) {
    %c0_i32 = arith.constant 0 : i32
    return %arg0, %arg2 : i32, i32
  }
  func.func @transform_1(%arg0: i32, %arg1: i32, %arg2: i32) -> (i32, i32) {
    %c0_i32 = arith.constant 0 : i32
    return %arg2, %arg1 : i32, i32
  }
  func.func @transform_2(%arg0: i32, %arg1: i32, %arg2: i32) -> (i32, i32) {
    %c0_i32 = arith.constant 0 : i32
    %c0_i32_0 = arith.constant 0 : i32
    return %c0_i32, %arg1 : i32, i32
  }
  func.func @transform_3(%arg0: i32, %arg1: i32, %arg2: i32) -> (i32, i32) {
    %c0_i32 = arith.constant 0 : i32
    return %arg0, %arg1 : i32, i32
  }
}

</mosaic_0001>

<llo_original>
// kernel: tpu_custom_call.1
$region0: #{tpu_custom_call.1}
  #allocation0 [shape = 'u32[]', space=smem, size = 0x4, offset = 0x4, fixed_abs, tag = 'smem constant byte address 0x4 - core index']
  #allocation1 [shape = 'u32[144,128]{1,0:T(1,128)}', space=vmem, size = 0x12000, scoped, tag = 'internal scratch']
  %s0 = inlined_call_operand.hbm [shape: f32[16,128], index: 0, kind: input, shape index: {}]
  %s1 = inlined_call_operand.hbm [shape: f32[128,128], index: 1, kind: input, shape index: {}]
  %s2 = inlined_call_operand.vmem [shape: f32[1,128], index: 2, kind: input, shape index: {}]
  %s3 = inlined_call_operand.hbm [shape: f32[16,128], index: 3, kind: output, shape index: {}]
  %s4 = sld [smem:[#allocation0]]
  $region38: #{tpu_custom_call.1} parent=0
    _
  %s6 = ssub.s32 1, %s4
  %s7 = scalar_select 0, %s6, %s4
  $region1: #{tpu_custom_call.1} parent=0
    #allocation2 [shape = 'u8[8192]{0}', space=vmem, size = 0x2000, scoped, tag = 'input window, operand 0, single buffered']
    #allocation3 [shape = 's32[1]{0}', space=sflag, size = 0x4, scoped, tag = 'scoped memory for tpu_custom_call.1']
    #allocation4 [shape = 's32[1]{0}', space=sflag, size = 0x4, scoped, tag = 'scoped memory for tpu_custom_call.1']
    #allocation5 [shape = 'u8[65536]{0}', space=vmem, size = 0x10000, scoped, tag = 'input window, operand 1, single buffered']
    #allocation6 [shape = 's32[1]{0}', space=sflag, size = 0x4, scoped, tag = 'scoped memory for tpu_custom_call.1']
    #allocation7 [shape = 'u8[8192]{0}', space=vmem, size = 0x2000, scoped, tag = 'output window, operand 0, single buffered']
    %8 = vsyncpa [#allocation3], 0
    %9 = vsyncpa [#allocation6], 0
    %10 = vsyncpa [#allocation4], 0
    // Predicated region
    $region2: #{tpu_custom_call.1} parent=1 // pred_check
      _
    $region3: #{tpu_custom_call.1} parent=1 // pred_check_branch
      %12 = sbr.rel (0) target = $region5
    $region4: #{tpu_custom_call.1} parent=1 // pred_region
      %s14 = ssub.s32 256, 256
      %15 = vsyncadd [#allocation3], %s14
      %s16 = sshll.u32 [#allocation2], 4
      %s17 = int_to_ptr.vmem [resolvable:$true] %s16
      %22 = dma.hbm_to_vmem [thread:$0]  %s0, 256, %s17, [#allocation3], 128, 128, 8
    $region5: #{tpu_custom_call.1} parent=1 // pred_fallthru
      _
    // Predicated region
    $region6: #{tpu_custom_call.1} parent=1 // pred_check
      _
    $region7: #{tpu_custom_call.1} parent=1 // pred_check_branch
      %24 = sbr.rel (0) target = $region9
    $region8: #{tpu_custom_call.1} parent=1 // pred_region
      %s26 = ssub.s32 2048, 2048
      %27 = vsyncadd [#allocation6], %s26
      %s28 = sshll.u32 [#allocation5], 4
      %s29 = int_to_ptr.vmem [resolvable:$true] %s28
      %34 = dma.hbm_to_vmem [thread:$0]  %s1, 2048, %s29, [#allocation6], 128, 128, 8
    $region9: #{tpu_custom_call.1} parent=1 // pred_fallthru
      _
    // Predicated region
    $region10: #{tpu_custom_call.1} parent=1 // pred_check
      _
    $region11: #{tpu_custom_call.1} parent=1 // pred_check_branch
      %36 = sbr.rel (0) target = $region13
    $region12: #{tpu_custom_call.1} parent=1 // pred_region
      _
    $region13: #{tpu_custom_call.1} parent=1 // pred_fallthru
      _
    // Predicated region
    $region14: #{tpu_custom_call.1} parent=1 // pred_check
      _
    $region15: #{tpu_custom_call.1} parent=1 // pred_check_branch
      %38 = sbr.rel (0) target = $region17
    $region16: #{tpu_custom_call.1} parent=1 // pred_region
      %39 = dma.done [#allocation3], 256
    $region17: #{tpu_custom_call.1} parent=1 // pred_fallthru
      _
    // Predicated region
    $region18: #{tpu_custom_call.1} parent=1 // pred_check
      _
    $region19: #{tpu_custom_call.1} parent=1 // pred_check_branch
      %41 = sbr.rel (0) target = $region21
    $region20: #{tpu_custom_call.1} parent=1 // pred_region
      %42 = dma.done [#allocation6], 2048
    $region21: #{tpu_custom_call.1} parent=1 // pred_fallthru
      _
    %p43 = scmp.eq.s32.totalorder 0, 0
    // Predicated region
    $region22: #{tpu_custom_call.1} parent=1 // pred_check
      %p44 = pneg %p43
    $region23: #{tpu_custom_call.1} parent=1 // pred_check_branch
      %46 = sbr.rel (%p44) target = $region25
    $region24: #{tpu_custom_call.1} parent=1 // pred_region
      %47 = vst [vmem:[#allocation7] sm:$0xff] 0.0
      %48 = vst [vmem:[#allocation7 + $0x8] sm:$0xff] 0.0
    $region25: #{tpu_custom_call.1} parent=1 // pred_fallthru
      _
    %v49 = vld [vmem:[#allocation7] sm:$0xff]
    %v50 = vld [vmem:[#allocation7 + $0x8] sm:$0xff]
    %v51 = vld [vmem:[#allocation2] sm:$0xff]
    %v52 = vld [vmem:[#allocation2 + $0x8] sm:$0xff]
    %v53 = vld [vmem:[#allocation5] sm:$0xff]
    %v54 = vld [vmem:[#allocation5 + $0x8] sm:$0xff]
    %v55 = vld [vmem:[#allocation5 + $0x10] sm:$0xff]
    %v56 = vld [vmem:[#allocation5 + $0x18] sm:$0xff]
    %v57 = vld [vmem:[#allocation5 + $0x20] sm:$0xff]
    %v58 = vld [vmem:[#allocation5 + $0x28] sm:$0xff]
    %v59 = vld [vmem:[#allocation5 + $0x30] sm:$0xff]
    %v60 = vld [vmem:[#allocation5 + $0x38] sm:$0xff]
    %v61 = vld [vmem:[#allocation5 + $0x40] sm:$0xff]
    %v62 = vld [vmem:[#allocation5 + $0x48] sm:$0xff]
    %v63 = vld [vmem:[#allocation5 + $0x50] sm:$0xff]
    %v64 = vld [vmem:[#allocation5 + $0x58] sm:$0xff]
    %v65 = vld [vmem:[#allocation5 + $0x60] sm:$0xff]
    %v66 = vld [vmem:[#allocation5 + $0x68] sm:$0xff]
    %v67 = vld [vmem:[#allocation5 + $0x70] sm:$0xff]
    %v68 = vld [vmem:[#allocation5 + $0x78] sm:$0xff]
    %69 = vmatprep.subr.mxu0 0.0
    %70 = vmatpush1.msra.mxu0 %v53
    %71 = vmatprep.subr.mxu0 0.0
    %72 = vmatpush1.msra.mxu0 %v54
    %73 = vmatprep.subr.mxu0 0.0
    %74 = vmatpush1.msra.mxu0 %v55
    %75 = vmatprep.subr.mxu0 0.0
    %76 = vmatpush1.msra.mxu0 %v56
    %77 = vmatprep.subr.mxu0 0.0
    %78 = vmatpush1.msra.mxu0 %v57
    %79 = vmatprep.subr.mxu0 0.0
    %80 = vmatpush1.msra.mxu0 %v58
    %81 = vmatprep.subr.mxu0 0.0
    %82 = vmatpush1.msra.mxu0 %v59
    %83 = vmatprep.subr.mxu0 0.0
    %84 = vmatpush1.msra.mxu0 %v60
    %85 = vmatprep.subr.mxu0 0.0
    %86 = vmatpush1.msra.mxu0 %v61
    %87 = vmatprep.subr.mxu0 0.0
    %88 = vmatpush1.msra.mxu0 %v62
    %89 = vmatprep.subr.mxu0 0.0
    %90 = vmatpush1.msra.mxu0 %v63
    %91 = vmatprep.subr.mxu0 0.0
    %92 = vmatpush1.msra.mxu0 %v64
    %93 = vmatprep.subr.mxu0 0.0
    %94 = vmatpush1.msra.mxu0 %v65
    %95 = vmatprep.subr.mxu0 0.0
    %96 = vmatpush1.msra.mxu0 %v66
    %97 = vmatprep.subr.mxu0 0.0
    %98 = vmatpush1.msra.mxu0 %v67
    %99 = vmatprep.subr.mxu0 0.0
    %100 = vmatpush1.msra.mxu0 %v68
    %101 = vmatprep.subr.mxu0 0.0
    %102 = vmatpush1.msra.mxu0 0.0
    %103 = vmatprep.subr.mxu0 0.0
    %104 = vmatpush1.msra.mxu0 0.0
    %105 = vmatprep.subr.mxu0 0.0
    %106 = vmatpush1.msra.mxu0 0.0
    %107 = vmatprep.subr.mxu0 0.0
    %108 = vmatpush1.msra.mxu0 0.0
    %109 = vmatprep.subr.mxu0 0.0
    %110 = vmatpush1.msra.mxu0 0.0
    %111 = vmatprep.subr.mxu0 0.0
    %112 = vmatpush1.msra.mxu0 0.0
    %113 = vmatprep.subr.mxu0 0.0
    %114 = vmatpush1.msra.mxu0 0.0
    %115 = vmatprep.subr.mxu0 0.0
    %116 = vmatpush1.msra.mxu0 0.0
    %117 = vmatprep.subr.mxu0 0.0
    %118 = vmatpush1.msra.mxu0 0.0
    %119 = vmatprep.subr.mxu0 0.0
    %120 = vmatpush1.msra.mxu0 0.0
    %121 = vmatprep.subr.mxu0 0.0
    %122 = vmatpush1.msra.mxu0 0.0
    %123 = vmatprep.subr.mxu0 0.0
    %124 = vmatpush1.msra.mxu0 0.0
    %125 = vmatprep.subr.mxu0 0.0
    %126 = vmatpush1.msra.mxu0 0.0
    %127 = vmatprep.subr.mxu0 0.0
    %128 = vmatpush1.msra.mxu0 0.0
    %129 = vmatprep.subr.mxu0 0.0
    %130 = vmatpush1.msra.mxu0 0.0
    %131 = vmatprep.subr.mxu0 0.0
    %132 = vmatpush1.msra.mxu0 0.0
    %133 = vmatprep.mubr.f32.mxu0 0.0
    %134 = vmatmul.mubr.f32.gmra.mrb[0].mxu0 %v51
    %v135 = vpop.f32.mrb[0].mxu0
    %v136 = vadd.f32 0.0, %v135
    %v137 = vpop.f32.mrb[0].mxu0
    %138 = vmatprep.mubr.f32.mxu0 0.0
    %139 = vmatmul.mubr.f32.gmra.mrb[0].mxu0 %v52
    %v140 = vpop.f32.mrb[0].mxu0
    %v141 = vadd.f32 0.0, %v140
    %v142 = vpop.f32.mrb[0].mxu0
    %143 = vdwg.mxu0
    %v144 = vadd.f32 %v49, %v136
    %v145 = vadd.f32 %v50, %v141
    %146 = vst [vmem:[#allocation7] sm:$0xff] %v144
    %147 = vst [vmem:[#allocation7 + $0x8] sm:$0xff] %v145
    // Predicated region
    $region26: #{tpu_custom_call.1} parent=1 // pred_check
      %p148 = pneg %p43
    $region27: #{tpu_custom_call.1} parent=1 // pred_check_branch
      %150 = sbr.rel (%p148) target = $region29
    $region28: #{tpu_custom_call.1} parent=1 // pred_region
      %v151 = vld [vmem:[#allocation7] sm:$0xff]
      %v152 = vld [vmem:[#allocation7 + $0x8] sm:$0xff]
      %v153 = vld [vmem:[%s2] sm:$0x1]
      %v155 = vlaneseq
      %v156 = vshrl.u32 %v155, 7
      %v157 = vsub.s32 0, %v156
      %v158 = vrot.slane %v153, %v157
      %v160 = vadd.f32 %v151, %v158
      %v161 = vadd.f32 %v152, %v158
      %162 = vst [vmem:[#allocation7] sm:$0xff] %v160
      %163 = vst [vmem:[#allocation7 + $0x8] sm:$0xff] %v161
    $region29: #{tpu_custom_call.1} parent=1 // pred_fallthru
      _
    // Predicated region
    $region30: #{tpu_custom_call.1} parent=1 // pred_check
      _
    $region31: #{tpu_custom_call.1} parent=1 // pred_check_branch
      %165 = sbr.rel (0) target = $region33
    $region32: #{tpu_custom_call.1} parent=1 // pred_region
      %s167 = ssub.s32 256, 256
      %168 = vsyncadd [#allocation4], %s167
      %s169 = sshll.u32 [#allocation7], 4
      %s170 = int_to_ptr.vmem [resolvable:$true] %s169
      %175 = dma.vmem_to_hbm [thread:$0]  %s170, 256, %s3, [#allocation4], 128, 128, 8
    $region33: #{tpu_custom_call.1} parent=1 // pred_fallthru
      _
    // Predicated region
    $region34: #{tpu_custom_call.1} parent=1 // pred_check
      _
    $region35: #{tpu_custom_call.1} parent=1 // pred_check_branch
      %177 = sbr.rel (0) target = $region37
    $region36: #{tpu_custom_call.1} parent=1 // pred_region
      %178 = dma.done [#allocation4], 256
    $region37: #{tpu_custom_call.1} parent=1 // pred_fallthru
      _
    %179 = vsyncpa [#allocation3], 1
    %180 = vsyncpa [#allocation6], 1
    %181 = vsyncpa [#allocation4], 1

</llo_original>
